<compile_context>
chip_gen: v7x
topology: tpu7x:2x2x1
jax: 0.10.0
libtpu: 0.0.40
codegen_flags: <defaults>
</compile_context>

<pallas_src>
import jax
import jax.numpy as jnp
from jax.experimental import pallas as pl
from jax.experimental.pallas import tpu as pltpu


def _weighted_emotion_kernel(len_ref, scores_ref, out_ref):
    # len_ref:    (N, Bt)      chunk token-lengths, batch on the lane axis
    # scores_ref: (N, E, Bt)   per-chunk emotion scores
    # out_ref:    (E, Bt)      length-weighted emotion scores per document
    lengths = len_ref[...]                                    # (N, Bt) f32
    total = jnp.sum(lengths, axis=0, keepdims=True)           # (1, Bt) sublane-axis reduce
    # Exact division: matches the PyTorch `lengths / lengths.sum()` to float
    # rounding (division-by-zero if all lengths are 0 matches the original).
    weights = lengths / total                                 # (N, Bt) VPU
    weighted = weights[:, None, :] * scores_ref[...]          # (N, E, Bt) broadcast-mul
    out_ref[...] = jnp.sum(weighted, axis=0)                  # (E, Bt): N elementwise adds


def emotion_weighted_scores(lengths, scores, *, block_b=128):
    """Batched EmotionPredictor score reduction.

    lengths: (B, N) int/float chunk token-lengths per document
    scores : (B, N, E) float  per-chunk emotion scores (sorted-label order)
    returns: (B, E) float32   length-weighted emotion scores per document
    """
    b, n, e = scores.shape
    assert lengths.shape == (b, n)

    # Lane-dense layout: put the batch on the last (lane) axis.  Wrapper-side
    # transposes are layout plumbing only.
    lengths_t = lengths.astype(jnp.float32).T                        # (N, B)
    scores_t = jnp.transpose(scores.astype(jnp.float32), (1, 2, 0))  # (N, E, B)

    if b % block_b != 0:
        # Full-array block: the (8,128) divisibility rule is waived when the
        # block equals the full array dims (covers the single-document case).
        block_b = b
    grid = (b // block_b,)

    out = pl.pallas_call(
        _weighted_emotion_kernel,
        out_shape=jax.ShapeDtypeStruct((e, b), jnp.float32),
        grid=grid,
        in_specs=[
            pl.BlockSpec((n, block_b), lambda i: (0, i)),
            pl.BlockSpec((n, e, block_b), lambda i: (0, 0, i)),
        ],
        out_specs=pl.BlockSpec((e, block_b), lambda i: (0, i)),
        compiler_params=pltpu.CompilerParams(
            # Batch axis is fully independent -> shard across TensorCores (v7x).
            dimension_semantics=("parallel",),
        ),
    )(lengths_t, scores_t)
    return out.T  # (B, E)


def emotion_weighted_scores_single(lengths, scores):
    """Single-document path matching the original module: (N,), (N, E) -> (E,)."""
    return emotion_weighted_scores(lengths[None, :], scores[None, :, :])[0]


if __name__ == "__main__":
    key = jax.random.PRNGKey(0)
    k_len, k_scores = jax.random.split(key)

    B = 8           # documents batched per pallas_call (small demo shapes)
    N_CHUNKS = 8    # overflowing token windows per document
    N_EMOTIONS = 9  # sorted ['anger','disgust','fear','inspiration','joy','love','neutral','sadness','suprise']

    # Synthetic chunk word-counts (stand-in for len(tokens_string.split())).
    lengths = jax.random.randint(
        k_len, (B, N_CHUNKS), minval=20, maxval=200).astype(jnp.float32)
    # Synthetic multi-label classifier scores in (0, 1), sorted-label order.
    scores = jax.nn.sigmoid(
        jax.random.normal(k_scores, (B, N_CHUNKS, N_EMOTIONS), dtype=jnp.float32))

    out = emotion_weighted_scores(lengths, scores)
    out = jax.block_until_ready(out)

    # Pure-JAX reference of the PyTorch math (per document).
    weights_ref = lengths / jnp.sum(lengths, axis=1, keepdims=True)
    ref = jnp.sum(weights_ref[:, :, None] * scores, axis=1)
    assert out.shape == (B, N_EMOTIONS)
    assert jnp.allclose(out, ref, atol=1e-5, rtol=1e-5), (out, ref)

    # Single-document path (original module semantics: one payload -> (E,)).
    out1 = jax.block_until_ready(
        emotion_weighted_scores_single(lengths[0], scores[0]))
    assert out1.shape == (N_EMOTIONS,)
    assert jnp.allclose(out1, ref[0], atol=1e-5, rtol=1e-5), (out1, ref[0])

    print("KERNEL_OK")
</pallas_src>

<mosaic_0001>
module attributes {stable_mosaic.version = 11 : i64} {
  func.func @_weighted_emotion_kernel(%arg0: i32, %arg1: memref<8x8xf32, #tpu.memory_space<vmem>>, %arg2: memref<8x9x8xf32, #tpu.memory_space<vmem>>, %arg3: memref<9x8xf32, #tpu.memory_space<vmem>>) attributes {dimension_semantics = [#tpu.dimension_semantics<parallel>], iteration_bounds = array<i64: 1>, scalar_prefetch = 0 : i64, scratch_operands = 0 : i64, tpu.core_type = #tpu.core_type<tc>, window_params = [{transform_indices = @transform_0, window_bounds = array<i64: 8, 8>}, {transform_indices = @transform_1, window_bounds = array<i64: 8, 9, 8>}, {transform_indices = @transform_2, window_bounds = array<i64: 9, 8>}]} {
    %c0 = arith.constant 0 : index
    %c0_0 = arith.constant 0 : index
    %0 = vector.load %arg1[%c0, %c0_0] : memref<8x8xf32, #tpu.memory_space<vmem>>, vector<8x8xf32>
    %cst = arith.constant dense<0.000000e+00> : vector<8xf32>
    %1 = vector.multi_reduction <add>, %0, %cst [0] : vector<8x8xf32> to vector<8xf32>
    %2 = vector.shape_cast %1 : vector<8xf32> to vector<1x8xf32>
    %3 = vector.broadcast %2 : vector<1x8xf32> to vector<8x8xf32>
    %4 = arith.divf %0, %3 : vector<8x8xf32>
    %5 = vector.shape_cast %4 : vector<8x8xf32> to vector<8x1x8xf32>
    %c0_1 = arith.constant 0 : index
    %c0_2 = arith.constant 0 : index
    %c0_3 = arith.constant 0 : index
    %6 = vector.load %arg2[%c0_1, %c0_2, %c0_3] : memref<8x9x8xf32, #tpu.memory_space<vmem>>, vector<8x9x8xf32>
    %7 = vector.broadcast %5 : vector<8x1x8xf32> to vector<8x9x8xf32>
    %8 = arith.mulf %7, %6 : vector<8x9x8xf32>
    %cst_4 = arith.constant dense<0.000000e+00> : vector<9x8xf32>
    %9 = vector.multi_reduction <add>, %8, %cst_4 [0] : vector<8x9x8xf32> to vector<9x8xf32>
    %c0_5 = arith.constant 0 : index
    %c0_6 = arith.constant 0 : index
    %10 = vector.load %arg3[%c0_5, %c0_6] : memref<9x8xf32, #tpu.memory_space<vmem>>, vector<9x8xf32>
    tpu.vector_store %arg3[%c0_5, %c0_6], %9 {strides = array<i32>} : memref<9x8xf32, #tpu.memory_space<vmem>>, vector<9x8xf32>,
    return
  }
  func.func @transform_0(%arg0: i32) -> (i32, i32) {
    %c0_i32 = arith.constant 0 : i32
    %c0_i32_0 = arith.constant 0 : i32
    return %c0_i32, %arg0 : i32, i32
  }
  func.func @transform_1(%arg0: i32) -> (i32, i32, i32) {
    %c0_i32 = arith.constant 0 : i32
    %c0_i32_0 = arith.constant 0 : i32
    %c0_i32_1 = arith.constant 0 : i32
    return %c0_i32, %c0_i32_0, %arg0 : i32, i32, i32
  }
  func.func @transform_2(%arg0: i32) -> (i32, i32) {
    %c0_i32 = arith.constant 0 : i32
    %c0_i32_0 = arith.constant 0 : i32
    return %c0_i32, %arg0 : i32, i32
  }
}

</mosaic_0001>

<llo_original>
// kernel: tpu_custom_call.1
$region0: #{tpu_custom_call.1}
  #allocation0 [shape = 'u32[]', space=smem, size = 0x4, offset = 0x4, fixed_abs, tag = 'smem constant byte address 0x4 - core index']
  #allocation1 [shape = 'u32[144,128]{1,0:T(1,128)}', space=vmem, size = 0x12000, scoped, tag = 'internal scratch']
  %s0 = inlined_call_operand.vmem [shape: f32[8,8], index: 0, kind: input, shape index: {}]
  %s1 = inlined_call_operand.vmem [shape: f32[8,9,8], index: 1, kind: input, shape index: {}]
  %s2 = inlined_call_operand.vmem [shape: f32[9,8], index: 2, kind: output, shape index: {}]
  %s3 = sld [smem:[#allocation0]]
  $region18: #{tpu_custom_call.1} parent=0
    _
  %s5 = ssub.s32 1, %s3
  %s6 = scalar_select 0, %s5, %s3
  // Predicated region
  $region2: #{tpu_custom_call.1} parent=0 // pred_check
    _
  $region3: #{tpu_custom_call.1} parent=0 // pred_check_branch
    %8 = sbr.rel (0) target = $region5
  $region4: #{tpu_custom_call.1} parent=0 // pred_region
    _
  $region5: #{tpu_custom_call.1} parent=0 // pred_fallthru
    _
  // Predicated region
  $region6: #{tpu_custom_call.1} parent=0 // pred_check
    _
  $region7: #{tpu_custom_call.1} parent=0 // pred_check_branch
    %10 = sbr.rel (0) target = $region9
  $region8: #{tpu_custom_call.1} parent=0 // pred_region
    _
  $region9: #{tpu_custom_call.1} parent=0 // pred_fallthru
    _
  %v11 = vld [vmem:[%s0] sm:$0xff]
  %vm12 = vcmask 64512
  %v13 = vsel %vm12, %v11, 0.0
  %v14 = vrot.slane %v13, 4
  %v15 = vadd.f32 %v13, %v14
  %v16 = vrot.slane %v15, 2
  %v17 = vadd.f32 %v15, %v16
  %v18 = vrot.slane %v17, 1
  %v19 = vadd.f32 %v17, %v18
  %v20 = vrcp.pop %v19
  %v21 = vmul.f32 %v11, %v20
  %v23 = vcombine.high %v21, %v21
  %v25 = vunpack.c.l.s4 1966171168
  %v26 = vunpack.c.0.s8 %v25
  %v27 = vlaneseq
  %v28 = vshrl.u32 %v27, 7
  %v29 = vsub.s32 %v26, %v28
  %v30 = vrot.slane %v21, %v29
  %v32 = vunpack.c.l.s4 1966171168
  %v33 = vunpack.c.0.s8 %v32
  %v34 = vlaneseq
  %v35 = vshrl.u32 %v34, 7
  %v36 = vsub.s32 %v33, %v35
  %v37 = vrot.slane %v23, %v36
  %v38 = vcombine.high %v30, %v30
  %v39 = vcombine.high %v37, %v37
  %v41 = vunpack.c.l.s4 1966171168
  %v42 = vunpack.c.0.s8 %v41
  %v43 = vlaneseq
  %v44 = vshrl.u32 %v43, 7
  %v45 = vsub.s32 %v42, %v44
  %v46 = vrot.slane %v30, %v45
  %v48 = vunpack.c.l.s4 1966171168
  %v49 = vunpack.c.0.s8 %v48
  %v50 = vlaneseq
  %v51 = vshrl.u32 %v50, 7
  %v52 = vsub.s32 %v49, %v51
  %v53 = vrot.slane %v37, %v52
  %v55 = vunpack.c.l.s4 1966171168
  %v56 = vunpack.c.0.s8 %v55
  %v57 = vlaneseq
  %v58 = vshrl.u32 %v57, 7
  %v59 = vsub.s32 %v56, %v58
  %v60 = vrot.slane %v38, %v59
  %v62 = vunpack.c.l.s4 1966171168
  %v63 = vunpack.c.0.s8 %v62
  %v64 = vlaneseq
  %v65 = vshrl.u32 %v64, 7
  %v66 = vsub.s32 %v63, %v65
  %v67 = vrot.slane %v39, %v66
  %v68 = vcombine.high %v46, %v46
  %v69 = vcombine.high %v53, %v53
  %v70 = vcombine.high %v60, %v60
  %v71 = vcombine.high %v67, %v67
  %v72 = vld [vmem:[%s1] sm:$0xff]
  %v73 = vld [vmem:[%s1 + $0x8] sm:$0x1]
  %v74 = vld [vmem:[%s1 + $0x10] sm:$0xff]
  %v75 = vld [vmem:[%s1 + $0x18] sm:$0x1]
  %v76 = vld [vmem:[%s1 + $0x20] sm:$0xff]
  %v77 = vld [vmem:[%s1 + $0x28] sm:$0x1]
  %v78 = vld [vmem:[%s1 + $0x30] sm:$0xff]
  %v79 = vld [vmem:[%s1 + $0x38] sm:$0x1]
  %v80 = vld [vmem:[%s1 + $0x40] sm:$0xff]
  %v81 = vld [vmem:[%s1 + $0x48] sm:$0x1]
  %v82 = vld [vmem:[%s1 + $0x50] sm:$0xff]
  %v83 = vld [vmem:[%s1 + $0x58] sm:$0x1]
  %v84 = vld [vmem:[%s1 + $0x60] sm:$0xff]
  %v85 = vld [vmem:[%s1 + $0x68] sm:$0x1]
  %v86 = vld [vmem:[%s1 + $0x70] sm:$0xff]
  %v87 = vld [vmem:[%s1 + $0x78] sm:$0x1]
  %v88 = vlaneseq
  %v89 = vshrl.u32 %v88, 7
  %v90 = vsub.s32 0, %v89
  %v91 = vrot.slane %v46, %v90
  %v92 = vlaneseq
  %v93 = vshrl.u32 %v92, 7
  %v94 = vsub.s32 0, %v93
  %v95 = vrot.slane %v60, %v94
  %v96 = vlaneseq
  %v97 = vshrl.u32 %v96, 7
  %v98 = vsub.s32 0, %v97
  %v99 = vrot.slane %v68, %v98
  %v100 = vlaneseq
  %v101 = vshrl.u32 %v100, 7
  %v102 = vsub.s32 0, %v101
  %v103 = vrot.slane %v70, %v102
  %v104 = vlaneseq
  %v105 = vshrl.u32 %v104, 7
  %v106 = vsub.s32 0, %v105
  %v107 = vrot.slane %v53, %v106
  %v108 = vlaneseq
  %v109 = vshrl.u32 %v108, 7
  %v110 = vsub.s32 0, %v109
  %v111 = vrot.slane %v67, %v110
  %v112 = vlaneseq
  %v113 = vshrl.u32 %v112, 7
  %v114 = vsub.s32 0, %v113
  %v115 = vrot.slane %v69, %v114
  %v116 = vlaneseq
  %v117 = vshrl.u32 %v116, 7
  %v118 = vsub.s32 0, %v117
  %v119 = vrot.slane %v71, %v118
  %v128 = vmul.f32 %v91, %v72
  %v129 = vmul.f32 %v91, %v73
  %v130 = vmul.f32 %v95, %v74
  %v131 = vmul.f32 %v95, %v75
  %v132 = vmul.f32 %v99, %v76
  %v133 = vmul.f32 %v99, %v77
  %v134 = vmul.f32 %v103, %v78
  %v135 = vmul.f32 %v103, %v79
  %v136 = vmul.f32 %v107, %v80
  %v137 = vmul.f32 %v107, %v81
  %v138 = vmul.f32 %v111, %v82
  %v139 = vmul.f32 %v111, %v83
  %v140 = vmul.f32 %v115, %v84
  %v141 = vmul.f32 %v115, %v85
  %v142 = vmul.f32 %v119, %v86
  %v143 = vmul.f32 %v119, %v87
  %v144 = vsel %vm12, %v128, 0.0
  %v145 = vsel %vm12, %v130, 0.0
  %v146 = vadd.f32 %v144, %v145
  %v147 = vsel %vm12, %v132, 0.0
  %v148 = vadd.f32 %v146, %v147
  %v149 = vsel %vm12, %v134, 0.0
  %v150 = vadd.f32 %v148, %v149
  %v151 = vsel %vm12, %v136, 0.0
  %v152 = vadd.f32 %v150, %v151
  %v153 = vsel %vm12, %v138, 0.0
  %v154 = vadd.f32 %v152, %v153
  %v155 = vsel %vm12, %v140, 0.0
  %v156 = vadd.f32 %v154, %v155
  %v157 = vsel %vm12, %v142, 0.0
  %v158 = vadd.f32 %v156, %v157
  %vm159 = vcmask 57344
  %v160 = vsel %vm159, %v129, 0.0
  %v161 = vsel %vm159, %v131, 0.0
  %v162 = vadd.f32 %v160, %v161
  %v163 = vsel %vm159, %v133, 0.0
  %v164 = vadd.f32 %v162, %v163
  %v165 = vsel %vm159, %v135, 0.0
  %v166 = vadd.f32 %v164, %v165
  %v167 = vsel %vm159, %v137, 0.0
  %v168 = vadd.f32 %v166, %v167
  %v169 = vsel %vm159, %v139, 0.0
  %v170 = vadd.f32 %v168, %v169
  %v171 = vsel %vm159, %v141, 0.0
  %v172 = vadd.f32 %v170, %v171
  %v173 = vsel %vm159, %v143, 0.0
  %v174 = vadd.f32 %v172, %v173
  %175 = vst.msk [vmem:[%s2] sm:$0xff] %vm12, %v158
  %176 = vst.msk [vmem:[%s2 + $0x8] sm:$0x1] %vm159, %v174
  // Predicated region
  $region10: #{tpu_custom_call.1} parent=0 // pred_check
    _
  $region11: #{tpu_custom_call.1} parent=0 // pred_check_branch
    %178 = sbr.rel (0) target = $region13
  $region12: #{tpu_custom_call.1} parent=0 // pred_region
    _
  $region13: #{tpu_custom_call.1} parent=0 // pred_fallthru
    _
  // Predicated region
  $region14: #{tpu_custom_call.1} parent=0 // pred_check
    _
  $region15: #{tpu_custom_call.1} parent=0 // pred_check_branch
    %180 = sbr.rel (0) target = $region17
  $region16: #{tpu_custom_call.1} parent=0 // pred_region
    _
  $region17: #{tpu_custom_call.1} parent=0 // pred_fallthru
    _

</llo_original>
